<compile_context>
chip_gen: v5e
topology: v5e:2x2
jax: 0.10.0
libtpu: 0.0.40
codegen_flags: <defaults>
</compile_context>

<pallas_src>
import jax
import jax.numpy as jnp
from jax.experimental import pallas as pl
from jax.experimental.pallas import tpu as pltpu


HIDDEN = 50
LANE_TILE = 8192        # max batch (lane) tile; safe on v5e/v6e/v7x default scoped VMEM
SINGLE_BLOCK_MAX = 256  # below this: one full block; above: force >= 2 grid steps


def _odefunc_kernel(yt_ref, w1_ref, b1_ref, w2_ref, b2_ref, out_ref):
    """Feature-major ODE RHS: out = W2 @ tanh(W1 @ (y^3) + b1) + b2.

    Layouts (features on sublanes, batch on the 128-lane axis):
      yt_ref  : (2,  Bt)  state, feature-major
      w1_ref  : (50, 2)   Linear(2, 50).weight  (PyTorch (out, in) layout)
      b1_ref  : (50, 1)
      w2_ref  : (2,  50)  Linear(50, 2).weight  (PyTorch (out, in) layout)
      b2_ref  : (2,  1)
      out_ref : (2,  Bt)
    """
    yt = yt_ref[...]
    x = yt * yt * yt                                   # y ** 3 (VPU)

    # Layer 1: K=2 contraction as two broadcast FMAs on the VPU (skip the MXU).
    h = (w1_ref[:, 0:1] * x[0:1, :]
         + w1_ref[:, 1:2] * x[1:2, :]
         + b1_ref[...])                                # (50, Bt)
    h = jnp.tanh(h)                                    # EUP transcendental

    # Layer 2: K=50 contraction on the MXU, single lane-dense full-block store.
    out_ref[...] = (
        jnp.dot(w2_ref[...], h, preferred_element_type=jnp.float32)
        + b2_ref[...]
    )


def _batch_tile(B):
    """Batch (lane) tile size: full block for small B, else >=2 grid steps."""
    if B <= SINGLE_BLOCK_MAX:
        return B                       # block dims == array dims (allowed)
    half = pl.cdiv(B, 2)               # guarantee >= 2 steps (v7x megacore sharding)
    return min(LANE_TILE, 128 * pl.cdiv(half, 128))


def odefunc_forward_fm(t, yt, w1, b1, w2, b2):
    """Feature-major forward (no layout transposes): yt (2, B) -> (2, B) f32.

    Use this inside an ODE-solver loop so the state stays feature-major across
    stages and no per-call y.T / out.T XLA transposes are needed.
    """
    del t  # unused, PyTorch signature parity
    assert yt.shape[0] == 2
    B = yt.shape[1]
    b1c = b1.reshape(HIDDEN, 1)
    b2c = b2.reshape(2, 1)

    bt = _batch_tile(B)
    grid = (pl.cdiv(B, bt),)           # ragged last tile is masked by Pallas

    grid_spec = pltpu.PrefetchScalarGridSpec(
        num_scalar_prefetch=0,
        grid=grid,
        in_specs=[
            pl.BlockSpec((2, bt), lambda i: (0, i)),       # y^T tile (lane-dense)
            pl.BlockSpec((HIDDEN, 2), lambda i: (0, 0)),   # w1 (VMEM-resident)
            pl.BlockSpec((HIDDEN, 1), lambda i: (0, 0)),   # b1 (VMEM-resident)
            pl.BlockSpec((2, HIDDEN), lambda i: (0, 0)),   # w2 (VMEM-resident)
            pl.BlockSpec((2, 1), lambda i: (0, 0)),        # b2 (VMEM-resident)
        ],
        out_specs=pl.BlockSpec((2, bt), lambda i: (0, i)),
    )

    return pl.pallas_call(
        _odefunc_kernel,
        out_shape=jax.ShapeDtypeStruct((2, B), jnp.float32),
        grid_spec=grid_spec,
        compiler_params=pltpu.CompilerParams(
            dimension_semantics=("parallel",)),
    )(yt, w1, b1c, w2, b2c)


def odefunc_forward(t, y, w1, b1, w2, b2):
    """PyTorch-parity forward of ODEFunc: net(y**3) with y (B, 2) -> (B, 2).

    The two boundary transposes here are layout plumbing only; prefer
    `odefunc_forward_fm` inside a solver loop to avoid them entirely.
    """
    return odefunc_forward_fm(t, y.T, w1, b1, w2, b2).T


def init_params(key):
    # nn.init.normal_(weight, mean=0, std=0.1); bias = 0. PyTorch (out, in) layouts.
    k1, k2 = jax.random.split(key)
    w1 = 0.1 * jax.random.normal(k1, (HIDDEN, 2), dtype=jnp.float32)   # Linear(2, 50).weight
    b1 = jnp.zeros((HIDDEN,), dtype=jnp.float32)
    w2 = 0.1 * jax.random.normal(k2, (2, HIDDEN), dtype=jnp.float32)   # Linear(50, 2).weight
    b2 = jnp.zeros((2,), dtype=jnp.float32)
    return w1, b1, w2, b2


def _reference(y, w1, b1, w2, b2):
    hp = jax.lax.Precision.HIGHEST
    x = y ** 3
    h = jnp.tanh(jnp.dot(x, w1.T, precision=hp) + b1)
    return jnp.dot(h, w2.T, precision=hp) + b2


if __name__ == "__main__":
    key = jax.random.PRNGKey(0)
    kparam, ky_small, ky_big = jax.random.split(key, 3)
    w1, b1, w2, b2 = init_params(kparam)
    t = jnp.float32(0.0)  # unused, signature parity with forward(t, y)

    # Small batch — single full-block path (PyTorch-parity (B, 2) wrapper).
    B = 8
    y = jax.random.normal(ky_small, (B, 2), dtype=jnp.float32)
    out = jax.block_until_ready(odefunc_forward(t, y, w1, b1, w2, b2))
    ref = _reference(y, w1, b1, w2, b2)
    assert out.shape == (B, 2)
    assert jnp.allclose(out, ref, atol=1e-5, rtol=1e-4)

    # Larger, non-multiple-of-128 batch — tiled path with >= 2 "parallel" grid steps
    # and a ragged (masked) last tile; uses the transpose-free feature-major entry.
    Bb = 1000
    yb = jax.random.normal(ky_big, (Bb, 2), dtype=jnp.float32)
    outb_fm = jax.block_until_ready(odefunc_forward_fm(t, yb.T, w1, b1, w2, b2))
    refb = _reference(yb, w1, b1, w2, b2)
    assert outb_fm.shape == (2, Bb)
    assert jnp.allclose(outb_fm.T, refb, atol=1e-5, rtol=1e-4)

    print("KERNEL_OK")
</pallas_src>

<mosaic_0001>
module attributes {stable_mosaic.version = 11 : i64} {
  func.func @_odefunc_kernel(%arg0: i32, %arg1: memref<2x8xf32, #tpu.memory_space<vmem>>, %arg2: memref<50x2xf32, #tpu.memory_space<vmem>>, %arg3: memref<50x1xf32, #tpu.memory_space<vmem>>, %arg4: memref<2x50xf32, #tpu.memory_space<vmem>>, %arg5: memref<2x1xf32, #tpu.memory_space<vmem>>, %arg6: memref<2x8xf32, #tpu.memory_space<vmem>>) attributes {dimension_semantics = [#tpu.dimension_semantics<parallel>], iteration_bounds = array<i64: 1>, scalar_prefetch = 0 : i64, scratch_operands = 0 : i64, tpu.core_type = #tpu.core_type<tc>, window_params = [{transform_indices = @transform_0, window_bounds = array<i64: 2, 8>}, {pipeline_mode = #tpu.pipeline_mode<synchronous>, transform_indices = @transform_1, window_bounds = array<i64: 50, 2>}, {pipeline_mode = #tpu.pipeline_mode<synchronous>, transform_indices = @transform_2, window_bounds = array<i64: 50, 1>}, {pipeline_mode = #tpu.pipeline_mode<synchronous>, transform_indices = @transform_3, window_bounds = array<i64: 2, 50>}, {pipeline_mode = #tpu.pipeline_mode<synchronous>, transform_indices = @transform_4, window_bounds = array<i64: 2, 1>}, {transform_indices = @transform_5, window_bounds = array<i64: 2, 8>}]} {
    %c0 = arith.constant 0 : index
    %c0_0 = arith.constant 0 : index
    %0 = vector.load %arg1[%c0, %c0_0] : memref<2x8xf32, #tpu.memory_space<vmem>>, vector<2x8xf32>
    %1 = arith.mulf %0, %0 : vector<2x8xf32>
    %2 = arith.mulf %1, %0 : vector<2x8xf32>
    %c0_1 = arith.constant 0 : index
    %c0_2 = arith.constant 0 : index
    %3 = vector.load %arg2[%c0_1, %c0_2] : memref<50x2xf32, #tpu.memory_space<vmem>>, vector<50x1xf32>
    %4 = vector.extract_strided_slice %2 {offsets = [0, 0], sizes = [1, 8], strides = [1, 1]} : vector<2x8xf32> to vector<1x8xf32>
    %5 = vector.broadcast %3 : vector<50x1xf32> to vector<50x8xf32>
    %6 = vector.broadcast %4 : vector<1x8xf32> to vector<50x8xf32>
    %7 = arith.mulf %5, %6 : vector<50x8xf32>
    %c0_3 = arith.constant 0 : index
    %c1 = arith.constant 1 : index
    %8 = vector.load %arg2[%c0_3, %c1] : memref<50x2xf32, #tpu.memory_space<vmem>>, vector<50x1xf32>
    %9 = vector.extract_strided_slice %2 {offsets = [1, 0], sizes = [1, 8], strides = [1, 1]} : vector<2x8xf32> to vector<1x8xf32>
    %10 = vector.broadcast %8 : vector<50x1xf32> to vector<50x8xf32>
    %11 = vector.broadcast %9 : vector<1x8xf32> to vector<50x8xf32>
    %12 = arith.mulf %10, %11 : vector<50x8xf32>
    %13 = arith.addf %7, %12 : vector<50x8xf32>
    %c0_4 = arith.constant 0 : index
    %c0_5 = arith.constant 0 : index
    %14 = vector.load %arg3[%c0_4, %c0_5] : memref<50x1xf32, #tpu.memory_space<vmem>>, vector<50x1xf32>
    %15 = vector.broadcast %14 : vector<50x1xf32> to vector<50x8xf32>
    %16 = arith.addf %13, %15 : vector<50x8xf32>
    %17 = math.tanh %16 : vector<50x8xf32>
    %c0_6 = arith.constant 0 : index
    %c0_7 = arith.constant 0 : index
    %18 = vector.load %arg4[%c0_6, %c0_7] : memref<2x50xf32, #tpu.memory_space<vmem>>, vector<2x50xf32>
    %cst = arith.constant dense<0.000000e+00> : vector<2x8xf32>
    %19 = tpu.matmul %18, %17, %cst {dimension_numbers = #tpu.dot_dimension_numbers<[1], [0], [0], [1], [0, 0, 1, 1], [], []>} : vector<2x50xf32>, vector<50x8xf32>, vector<2x8xf32> -> vector<2x8xf32>
    %c0_8 = arith.constant 0 : index
    %c0_9 = arith.constant 0 : index
    %20 = vector.load %arg5[%c0_8, %c0_9] : memref<2x1xf32, #tpu.memory_space<vmem>>, vector<2x1xf32>
    %21 = vector.broadcast %20 : vector<2x1xf32> to vector<2x8xf32>
    %22 = arith.addf %19, %21 : vector<2x8xf32>
    %c0_10 = arith.constant 0 : index
    %c0_11 = arith.constant 0 : index
    %23 = vector.load %arg6[%c0_10, %c0_11] : memref<2x8xf32, #tpu.memory_space<vmem>>, vector<2x8xf32>
    tpu.vector_store %arg6[%c0_10, %c0_11], %22 {strides = array<i32>} : memref<2x8xf32, #tpu.memory_space<vmem>>, vector<2x8xf32>,
    return
  }
  func.func @transform_0(%arg0: i32) -> (i32, i32) {
    %c0_i32 = arith.constant 0 : i32
    %c0_i32_0 = arith.constant 0 : i32
    return %c0_i32, %arg0 : i32, i32
  }
  func.func @transform_1(%arg0: i32) -> (i32, i32) {
    %c0_i32 = arith.constant 0 : i32
    %c0_i32_0 = arith.constant 0 : i32
    %c0_i32_1 = arith.constant 0 : i32
    return %c0_i32, %c0_i32_0 : i32, i32
  }
  func.func @transform_2(%arg0: i32) -> (i32, i32) {
    %c0_i32 = arith.constant 0 : i32
    %c0_i32_0 = arith.constant 0 : i32
    %c0_i32_1 = arith.constant 0 : i32
    return %c0_i32, %c0_i32_0 : i32, i32
  }
  func.func @transform_3(%arg0: i32) -> (i32, i32) {
    %c0_i32 = arith.constant 0 : i32
    %c0_i32_0 = arith.constant 0 : i32
    %c0_i32_1 = arith.constant 0 : i32
    return %c0_i32, %c0_i32_0 : i32, i32
  }
  func.func @transform_4(%arg0: i32) -> (i32, i32) {
    %c0_i32 = arith.constant 0 : i32
    %c0_i32_0 = arith.constant 0 : i32
    %c0_i32_1 = arith.constant 0 : i32
    return %c0_i32, %c0_i32_0 : i32, i32
  }
  func.func @transform_5(%arg0: i32) -> (i32, i32) {
    %c0_i32 = arith.constant 0 : i32
    %c0_i32_0 = arith.constant 0 : i32
    return %c0_i32, %arg0 : i32, i32
  }
}

</mosaic_0001>

<llo_original>
// kernel: tpu_custom_call.1
$region0: #{tpu_custom_call.1}
  #allocation0 [shape = 'u32[]', space=smem, size = 0x4, offset = 0x4, fixed_abs, tag = 'smem constant byte address 0x4 - core index']
  #allocation1 [shape = 'u32[72,128]{1,0:T(1,128)}', space=vmem, size = 0x9000, scoped, tag = 'internal scratch']
  %s0 = inlined_call_operand.vmem [shape: f32[2,8], index: 0, kind: input, shape index: {}]
  %s1 = inlined_call_operand.vmem [shape: f32[50,2], index: 1, kind: input, shape index: {}]
  %s2 = inlined_call_operand.vmem [shape: f32[50,1], index: 2, kind: input, shape index: {}]
  %s3 = inlined_call_operand.vmem [shape: f32[2,50], index: 3, kind: input, shape index: {}]
  %s4 = inlined_call_operand.vmem [shape: f32[2,1], index: 4, kind: input, shape index: {}]
  %s5 = inlined_call_operand.hbm [shape: f32[2,8], index: 5, kind: output, shape index: {}]
  %s6 = sld [smem:[#allocation0]]
  $region30: #{tpu_custom_call.1} parent=0
    _
  %s8 = ssub.s32 1, %s6
  %s9 = scalar_select 0, %s8, %s6
  $region1: #{tpu_custom_call.1} parent=0
    #allocation2 [shape = 'u8[1024]{0}', space=vmem, size = 0x400, scoped, tag = 'output window, operand 0, single buffered']
    #allocation3 [shape = 's32[1]{0}', space=sflag, size = 0x4, scoped, tag = 'scoped memory for tpu_custom_call.1']
    %10 = vsyncpa [#allocation3], 0
    // Predicated region
    $region2: #{tpu_custom_call.1} parent=1 // pred_check
      _
    $region3: #{tpu_custom_call.1} parent=1 // pred_check_branch
      %12 = sbr.rel (0) target = $region5
    $region4: #{tpu_custom_call.1} parent=1 // pred_region
      _
    $region5: #{tpu_custom_call.1} parent=1 // pred_fallthru
      _
    // Predicated region
    $region6: #{tpu_custom_call.1} parent=1 // pred_check
      _
    $region7: #{tpu_custom_call.1} parent=1 // pred_check_branch
      %14 = sbr.rel (0) target = $region9
    $region8: #{tpu_custom_call.1} parent=1 // pred_region
      _
    $region9: #{tpu_custom_call.1} parent=1 // pred_fallthru
      _
    // Predicated region
    $region10: #{tpu_custom_call.1} parent=1 // pred_check
      _
    $region11: #{tpu_custom_call.1} parent=1 // pred_check_branch
      %16 = sbr.rel (0) target = $region13
    $region12: #{tpu_custom_call.1} parent=1 // pred_region
      _
    $region13: #{tpu_custom_call.1} parent=1 // pred_fallthru
      _
    // Predicated region
    $region14: #{tpu_custom_call.1} parent=1 // pred_check
      _
    $region15: #{tpu_custom_call.1} parent=1 // pred_check_branch
      %18 = sbr.rel (0) target = $region17
    $region16: #{tpu_custom_call.1} parent=1 // pred_region
      _
    $region17: #{tpu_custom_call.1} parent=1 // pred_fallthru
      _
    // Predicated region
    $region18: #{tpu_custom_call.1} parent=1 // pred_check
      _
    $region19: #{tpu_custom_call.1} parent=1 // pred_check_branch
      %20 = sbr.rel (0) target = $region21
    $region20: #{tpu_custom_call.1} parent=1 // pred_region
      _
    $region21: #{tpu_custom_call.1} parent=1 // pred_fallthru
      _
    %v21 = vld [vmem:[%s0] sm:$0x3]
    %v22 = vmul.f32 %v21, %v21
    %v23 = vmul.f32 %v22, %v21
    %v24 = vld [vmem:[%s1] sm:$0xff]
    %v25 = vld [vmem:[%s1 + $0x8] sm:$0xff]
    %v26 = vld [vmem:[%s1 + $0x10] sm:$0xff]
    %v27 = vld [vmem:[%s1 + $0x18] sm:$0xff]
    %v28 = vld [vmem:[%s1 + $0x20] sm:$0xff]
    %v29 = vld [vmem:[%s1 + $0x28] sm:$0xff]
    %v30 = vld [vmem:[%s1 + $0x30] sm:$0x3]
    %32 = vset.pattern.permute.xlu0 0
    %33 = vperm.xlu0 %32, %v24
    %v34 = vpop.permute.xlu0 %33
    %37 = vset.pattern.permute.xlu0 0
    %38 = vperm.xlu0 %37, %v25
    %v39 = vpop.permute.xlu0 %38
    %42 = vset.pattern.permute.xlu0 0
    %43 = vperm.xlu0 %42, %v26
    %v44 = vpop.permute.xlu0 %43
    %47 = vset.pattern.permute.xlu0 0
    %48 = vperm.xlu0 %47, %v27
    %v49 = vpop.permute.xlu0 %48
    %52 = vset.pattern.permute.xlu0 0
    %53 = vperm.xlu0 %52, %v28
    %v54 = vpop.permute.xlu0 %53
    %57 = vset.pattern.permute.xlu0 0
    %58 = vperm.xlu0 %57, %v29
    %v59 = vpop.permute.xlu0 %58
    %62 = vset.pattern.permute.xlu0 0
    %63 = vperm.xlu0 %62, %v30
    %v64 = vpop.permute.xlu0 %63
    %v66 = vperm.slane %v23, 0
    %v67 = vmul.f32 %v34, %v66
    %v68 = vmul.f32 %v39, %v66
    %v69 = vmul.f32 %v44, %v66
    %v70 = vmul.f32 %v49, %v66
    %v71 = vmul.f32 %v54, %v66
    %v72 = vmul.f32 %v59, %v66
    %v73 = vmul.f32 %v64, %v66
    %74 = vset.pattern.permute.xlu0 1
    %75 = vperm.xlu0 %74, %v24
    %v76 = vpop.permute.xlu0 %75
    %78 = vset.pattern.permute.xlu0 1
    %79 = vperm.xlu0 %78, %v25
    %v80 = vpop.permute.xlu0 %79
    %82 = vset.pattern.permute.xlu0 1
    %83 = vperm.xlu0 %82, %v26
    %v84 = vpop.permute.xlu0 %83
    %86 = vset.pattern.permute.xlu0 1
    %87 = vperm.xlu0 %86, %v27
    %v88 = vpop.permute.xlu0 %87
    %90 = vset.pattern.permute.xlu0 1
    %91 = vperm.xlu0 %90, %v28
    %v92 = vpop.permute.xlu0 %91
    %94 = vset.pattern.permute.xlu0 1
    %95 = vperm.xlu0 %94, %v29
    %v96 = vpop.permute.xlu0 %95
    %98 = vset.pattern.permute.xlu0 1
    %99 = vperm.xlu0 %98, %v30
    %v100 = vpop.permute.xlu0 %99
    %v102 = vperm.slane %v23, 1
    %v103 = vmul.f32 %v76, %v102
    %v104 = vmul.f32 %v80, %v102
    %v105 = vmul.f32 %v84, %v102
    %v106 = vmul.f32 %v88, %v102
    %v107 = vmul.f32 %v92, %v102
    %v108 = vmul.f32 %v96, %v102
    %v109 = vmul.f32 %v100, %v102
    %v110 = vadd.f32 %v67, %v103
    %v111 = vadd.f32 %v68, %v104
    %v112 = vadd.f32 %v69, %v105
    %v113 = vadd.f32 %v70, %v106
    %v114 = vadd.f32 %v71, %v107
    %v115 = vadd.f32 %v72, %v108
    %v116 = vadd.f32 %v73, %v109
    %v117 = vld [vmem:[%s2] sm:$0xff]
    %v118 = vld [vmem:[%s2 + $0x8] sm:$0xff]
    %v119 = vld [vmem:[%s2 + $0x10] sm:$0xff]
    %v120 = vld [vmem:[%s2 + $0x18] sm:$0xff]
    %v121 = vld [vmem:[%s2 + $0x20] sm:$0xff]
    %v122 = vld [vmem:[%s2 + $0x28] sm:$0xff]
    %v123 = vld [vmem:[%s2 + $0x30] sm:$0x3]
    %125 = vset.pattern.permute.xlu0 0
    %126 = vperm.xlu0 %125, %v117
    %v127 = vpop.permute.xlu0 %126
    %130 = vset.pattern.permute.xlu0 0
    %131 = vperm.xlu0 %130, %v118
    %v132 = vpop.permute.xlu0 %131
    %135 = vset.pattern.permute.xlu0 0
    %136 = vperm.xlu0 %135, %v119
    %v137 = vpop.permute.xlu0 %136
    %140 = vset.pattern.permute.xlu0 0
    %141 = vperm.xlu0 %140, %v120
    %v142 = vpop.permute.xlu0 %141
    %145 = vset.pattern.permute.xlu0 0
    %146 = vperm.xlu0 %145, %v121
    %v147 = vpop.permute.xlu0 %146
    %150 = vset.pattern.permute.xlu0 0
    %151 = vperm.xlu0 %150, %v122
    %v152 = vpop.permute.xlu0 %151
    %155 = vset.pattern.permute.xlu0 0
    %156 = vperm.xlu0 %155, %v123
    %v157 = vpop.permute.xlu0 %156
    %v159 = vadd.f32 %v110, %v127
    %v160 = vadd.f32 %v111, %v132
    %v161 = vadd.f32 %v112, %v137
    %v162 = vadd.f32 %v113, %v142
    %v163 = vadd.f32 %v114, %v147
    %v164 = vadd.f32 %v115, %v152
    %v165 = vadd.f32 %v116, %v157
    %v166 = vtanh.pop %v159
    %v167 = vtanh.pop %v160
    %v168 = vtanh.pop %v161
    %v169 = vtanh.pop %v162
    %v170 = vtanh.pop %v163
    %v171 = vtanh.pop %v164
    %v172 = vtanh.pop %v165
    %v173 = vld [vmem:[%s3] sm:$0x3]
    %v174 = vld [vmem:[%s4] sm:$0x3]
    %176 = vset.pattern.permute.xlu0 0
    %177 = vperm.xlu0 %176, %v174
    %v178 = vpop.permute.xlu0 %177
    %vm180 = vcmask 408576
    %v182 = vsel %vm180, %v173, 0
    %vm184 = vcmask 1041408
    %v186 = vsel %vm184, %v172, 0
    %188 = vmatpush.msra.mxu0 0.0
    %189 = vmatpush.msra.mxu0 0.0
    %190 = vmatpush.msra.mxu0 0.0
    %191 = vmatpush.msra.mxu0 0.0
    %192 = vmatpush.msra.mxu0 0.0
    %193 = vmatpush.msra.mxu0 0.0
    %194 = vmatpush.msra.mxu0 0.0
    %195 = vmatpush.msra.mxu0 0.0
    %196 = vmatpush.msra.mxu0 0.0
    %197 = vmatpush.msra.mxu0 %v186
    %198 = vmatpush.msra.mxu0 %v171
    %199 = vmatpush.msra.mxu0 %v170
    %200 = vmatpush.msra.mxu0 %v169
    %201 = vmatpush.msra.mxu0 %v168
    %202 = vmatpush.msra.mxu0 %v167
    %203 = vmatpush.msra.mxu0 %v166
    %204 = vmatmul.f32.gmra.mxu0 %v182
    %v205 = vpop.f32.mrf.mxu0
    %v206 = vadd.f32 %v178, %v205
    %207 = vdwg.mxu0
    %vm208 = vcmask 58368
    %209 = vst.msk [vmem:[#allocation2] sm:$0x3] %vm208, %v206
    // Predicated region
    $region22: #{tpu_custom_call.1} parent=1 // pred_check
      _
    $region23: #{tpu_custom_call.1} parent=1 // pred_check_branch
      %211 = sbr.rel (0) target = $region25
    $region24: #{tpu_custom_call.1} parent=1 // pred_region
      %213 = vsyncadd [#allocation3], 0
      %s215 = sshll.u32 [#allocation2], 4
      %s216 = int_to_ptr.vmem [resolvable:$true] %s215
      %s217 = sshll.u32 %s5, 4
      %s218 = int_to_ptr.hbm [resolvable:$true] %s217
      %220 = dma.vmem_to_hbm [thread:$0]  %s216, 32, %s218, [#allocation3]
    $region25: #{tpu_custom_call.1} parent=1 // pred_fallthru
      _
    // Predicated region
    $region26: #{tpu_custom_call.1} parent=1 // pred_check
      _
    $region27: #{tpu_custom_call.1} parent=1 // pred_check_branch
      %222 = sbr.rel (0) target = $region29
    $region28: #{tpu_custom_call.1} parent=1 // pred_region
      %224 = dma.done [#allocation3], 32
    $region29: #{tpu_custom_call.1} parent=1 // pred_fallthru
      _
    %225 = vsyncpa [#allocation3], 1

</llo_original>
